<compile_context>
chip_gen: v7x
topology: tpu7x:2x2x1
jax: 0.10.0
libtpu: 0.0.40
codegen_flags: <defaults>
</compile_context>

<pallas_src>
import functools

import jax
import jax.numpy as jnp
from jax.experimental import pallas as pl
from jax.experimental.pallas import tpu as pltpu

BN_EPS = 1e-5


def _pick_tile(hw: int, max_tile: int = 1024) -> int:
    """Spatial (lane-axis) tile: whole plane if small, else the largest multiple of 128
    that divides H*W and fits the tile budget (keeps v7x's 64 MiB VMEM comfortable)."""
    if hw <= max_tile:
        return hw
    t = (max_tile // 128) * 128
    while t >= 128:
        if hw % t == 0:
            return t
        t -= 128
    return hw  # fallback: one whole plane per grid step


def _stats_kernel(x_ref, w_ref, gamma_ref, beta_ref,
                  scale_ref, shift_ref,
                  sum_ref, sumsq_ref, *, total_m):
    # x_ref: (Cin, T) slice of one batch plane; w_ref: (Cout, Cin)
    b = pl.program_id(0)
    t = pl.program_id(1)

    @pl.when(jnp.logical_and(b == 0, t == 0))
    def _init():
        sum_ref[...] = jnp.zeros_like(sum_ref)
        sumsq_ref[...] = jnp.zeros_like(sumsq_ref)

    # 1x1 conv on this tile: (Cout, Cin) @ (Cin, T) -> (Cout, T); lane axis = spatial.
    y = jnp.dot(w_ref[...], x_ref[...], preferred_element_type=jnp.float32)
    sum_ref[...] += jnp.sum(y, axis=1, keepdims=True)        # (Cout, 1)
    sumsq_ref[...] += jnp.sum(y * y, axis=1, keepdims=True)  # (Cout, 1)

    is_last = jnp.logical_and(b == pl.num_programs(0) - 1,
                              t == pl.num_programs(1) - 1)

    @pl.when(is_last)
    def _finalize():
        m = jnp.float32(total_m)
        mean = sum_ref[...] / m
        # E[y^2] - mean^2 can cancel slightly negative -> clamp before rsqrt.
        var = jnp.maximum(sumsq_ref[...] / m - mean * mean, 0.0)
        inv_std = jax.lax.rsqrt(var + BN_EPS)
        scale = gamma_ref[...] * inv_std
        scale_ref[...] = scale
        shift_ref[...] = beta_ref[...] - mean * scale


def _apply_kernel(x_ref, w_ref, scale_ref, shift_ref, o_ref):
    # Recompute y for this tile, apply folded BN affine + ReLU, lane-dense store.
    y = jnp.dot(w_ref[...], x_ref[...], preferred_element_type=jnp.float32)  # (Cout, T)
    o_ref[...] = jnp.maximum(y * scale_ref[...] + shift_ref[...], 0.0).astype(o_ref.dtype)


def simple_fpn_forward(x_nchw, conv_w, gamma, beta, *, max_tile=1024):
    """x_nchw: (B, Cin, H, W), conv_w: (Cout, Cin, 1, 1), gamma/beta: (Cout,)."""
    B, Cin, H, W = x_nchw.shape
    Cout = conv_w.shape[0]
    HW = H * W
    M = B * HW

    T = _pick_tile(HW, max_tile)
    n_tiles = HW // T

    # Zero-cost reshapes: NCHW is already (B, Cin, H*W); the (B, Cout, H*W) output
    # reshapes straight back to NCHW.  No XLA transposes on either side.
    x3 = x_nchw.reshape(B, Cin, HW).astype(jnp.float32)
    w2 = conv_w.reshape(Cout, Cin).astype(jnp.float32)
    gamma2 = gamma.reshape(Cout, 1).astype(jnp.float32)
    beta2 = beta.reshape(Cout, 1).astype(jnp.float32)

    grid = (B, n_tiles)
    x_spec = pl.BlockSpec((None, Cin, T), lambda b, t: (b, 0, t))
    w_spec = pl.BlockSpec((Cout, Cin), lambda b, t: (0, 0))
    vec_spec = pl.BlockSpec((Cout, 1), lambda b, t: (0, 0))
    o_spec = pl.BlockSpec((None, Cout, T), lambda b, t: (b, 0, t))

    itemsize = 4  # f32
    matmul_flops = 2 * M * Cin * Cout

    # ---------------- Pass 1: batch statistics -> folded scale/shift ----------------
    stats_cost = pl.CostEstimate(
        flops=matmul_flops + 4 * M * Cout,
        transcendentals=Cout,
        bytes_accessed=(x3.size + w2.size + 4 * Cout) * itemsize,
    )
    scale, shift = pl.pallas_call(
        functools.partial(_stats_kernel, total_m=M),
        grid=grid,
        in_specs=[x_spec, w_spec, vec_spec, vec_spec],
        out_specs=(vec_spec, vec_spec),
        out_shape=(jax.ShapeDtypeStruct((Cout, 1), jnp.float32),
                   jax.ShapeDtypeStruct((Cout, 1), jnp.float32)),
        scratch_shapes=[pltpu.VMEM((Cout, 1), jnp.float32),
                        pltpu.VMEM((Cout, 1), jnp.float32)],
        compiler_params=pltpu.CompilerParams(
            dimension_semantics=("arbitrary", "arbitrary")),
        cost_estimate=stats_cost,
    )(x3, w2, gamma2, beta2)

    # ---------------- Pass 2: conv + normalize + ReLU (parallel, lane-dense) --------
    apply_cost = pl.CostEstimate(
        flops=matmul_flops + 3 * M * Cout,
        transcendentals=0,
        bytes_accessed=(x3.size + w2.size + 2 * Cout + B * Cout * HW) * itemsize,
    )
    out3 = pl.pallas_call(
        _apply_kernel,
        grid=grid,
        in_specs=[x_spec, w_spec, vec_spec, vec_spec],
        out_specs=o_spec,
        out_shape=jax.ShapeDtypeStruct((B, Cout, HW), jnp.float32),
        compiler_params=pltpu.CompilerParams(
            dimension_semantics=("parallel", "parallel")),
        cost_estimate=apply_cost,
    )(x3, w2, scale, shift)

    return out3.reshape(B, Cout, H, W)


def reference_forward(x_nchw, conv_w, gamma, beta):
    """Pure-JAX reference of the same forward (for a tolerance check)."""
    B, Cin, H, W = x_nchw.shape
    Cout = conv_w.shape[0]
    x2d = jnp.transpose(x_nchw, (0, 2, 3, 1)).reshape(-1, Cin)
    y = x2d @ conv_w.reshape(Cout, Cin).T
    mean = jnp.mean(y, axis=0, keepdims=True)
    var = jnp.mean((y - mean) ** 2, axis=0, keepdims=True)
    y = (y - mean) / jnp.sqrt(var + BN_EPS) * gamma[None, :] + beta[None, :]
    y = jnp.maximum(y, 0.0)
    return y.reshape(B, H, W, Cout).transpose(0, 3, 1, 2)


if __name__ == "__main__":
    # Small shapes consistent with the module (in_planes=4, out_planes=8).
    B, Cin, H, W = 2, 4, 16, 16
    Cout = 8

    key = jax.random.PRNGKey(0)
    kx, kw = jax.random.split(key)

    x = jax.random.normal(kx, (B, Cin, H, W), dtype=jnp.float32)
    conv_w = jax.random.normal(kw, (Cout, Cin, 1, 1), dtype=jnp.float32) * 0.1
    gamma = jnp.ones((Cout,), dtype=jnp.float32)   # BN weight init
    beta = jnp.zeros((Cout,), dtype=jnp.float32)   # BN bias init

    out = simple_fpn_forward(x, conv_w, gamma, beta)
    out = jax.block_until_ready(out)

    ref = reference_forward(x, conv_w, gamma, beta)
    assert out.shape == (B, Cout, H, W), out.shape
    max_err = float(jnp.max(jnp.abs(out - ref)))
    assert jnp.allclose(out, ref, atol=1e-4, rtol=1e-4), max_err

    print("KERNEL_OK")
</pallas_src>

<mosaic_0001>
module attributes {stable_mosaic.version = 11 : i64} {
  func.func @_stats_kernel(%arg0: i32, %arg1: i32, %arg2: memref<1x4x256xf32, #tpu.memory_space<vmem>>, %arg3: memref<8x4xf32, #tpu.memory_space<vmem>>, %arg4: memref<8x1xf32, #tpu.memory_space<vmem>>, %arg5: memref<8x1xf32, #tpu.memory_space<vmem>>, %arg6: memref<8x1xf32, #tpu.memory_space<vmem>>, %arg7: memref<8x1xf32, #tpu.memory_space<vmem>>, %arg8: memref<8x1xf32, #tpu.memory_space<vmem>>, %arg9: memref<8x1xf32, #tpu.memory_space<vmem>>) attributes {dimension_semantics = [#tpu.dimension_semantics<arbitrary>, #tpu.dimension_semantics<arbitrary>], iteration_bounds = array<i64: 2, 1>, scalar_prefetch = 0 : i64, scratch_operands = 2 : i64, tpu.core_type = #tpu.core_type<tc>, window_params = [{transform_indices = @transform_0, window_bounds = array<i64: 1, 4, 256>}, {pipeline_mode = #tpu.pipeline_mode<synchronous>, transform_indices = @transform_1, window_bounds = array<i64: 8, 4>}, {pipeline_mode = #tpu.pipeline_mode<synchronous>, transform_indices = @transform_2, window_bounds = array<i64: 8, 1>}, {pipeline_mode = #tpu.pipeline_mode<synchronous>, transform_indices = @transform_3, window_bounds = array<i64: 8, 1>}, {pipeline_mode = #tpu.pipeline_mode<synchronous>, transform_indices = @transform_4, window_bounds = array<i64: 8, 1>}, {pipeline_mode = #tpu.pipeline_mode<synchronous>, transform_indices = @transform_5, window_bounds = array<i64: 8, 1>}]} {
    %c0_i32 = arith.constant 0 : i32
    %0 = arith.cmpi eq, %arg0, %c0_i32 : i32
    %c0_i32_0 = arith.constant 0 : i32
    %1 = arith.cmpi eq, %arg1, %c0_i32_0 : i32
    %2 = arith.andi %0, %1 : i1
    %3 = arith.extui %2 : i1 to i32
    %c0_i32_1 = arith.constant 0 : i32
    %4 = arith.cmpi ne, %3, %c0_i32_1 : i32
    scf.if %4 {
      %cst_18 = arith.constant 0.000000e+00 : f32
      %25 = vector.broadcast %cst_18 : f32 to vector<8x1xf32>
      %c0_19 = arith.constant 0 : index
      %c0_20 = arith.constant 0 : index
      %26 = vector.load %arg8[%c0_19, %c0_20] : memref<8x1xf32, #tpu.memory_space<vmem>>, vector<8x1xf32>
      tpu.vector_store %arg8[%c0_19, %c0_20], %25 {strides = array<i32>} : memref<8x1xf32, #tpu.memory_space<vmem>>, vector<8x1xf32>,
      %cst_21 = arith.constant 0.000000e+00 : f32
      %27 = vector.broadcast %cst_21 : f32 to vector<8x1xf32>
      %c0_22 = arith.constant 0 : index
      %c0_23 = arith.constant 0 : index
      %28 = vector.load %arg9[%c0_22, %c0_23] : memref<8x1xf32, #tpu.memory_space<vmem>>, vector<8x1xf32>
      tpu.vector_store %arg9[%c0_22, %c0_23], %27 {strides = array<i32>} : memref<8x1xf32, #tpu.memory_space<vmem>>, vector<8x1xf32>,
    } else {
    }
    %c0 = arith.constant 0 : index
    %c0_2 = arith.constant 0 : index
    %5 = vector.load %arg3[%c0, %c0_2] : memref<8x4xf32, #tpu.memory_space<vmem>>, vector<8x4xf32>
    %c0_3 = arith.constant 0 : index
    %c0_4 = arith.constant 0 : index
    %c0_5 = arith.constant 0 : index
    %6 = vector.load %arg2[%c0_3, %c0_4, %c0_5] : memref<1x4x256xf32, #tpu.memory_space<vmem>>, vector<1x4x256xf32>
    %7 = vector.shape_cast %6 : vector<1x4x256xf32> to vector<4x256xf32>
    %cst = arith.constant dense<0.000000e+00> : vector<8x256xf32>
    %8 = tpu.matmul %5, %7, %cst {dimension_numbers = #tpu.dot_dimension_numbers<[1], [0], [0], [1], [0, 0, 1, 1], [], []>} : vector<8x4xf32>, vector<4x256xf32>, vector<8x256xf32> -> vector<8x256xf32>
    %c0_6 = arith.constant 0 : index
    %c0_7 = arith.constant 0 : index
    %9 = vector.load %arg8[%c0_6, %c0_7] : memref<8x1xf32, #tpu.memory_space<vmem>>, vector<8x1xf32>
    %cst_8 = arith.constant dense<0.000000e+00> : vector<8xf32>
    %10 = vector.multi_reduction <add>, %8, %cst_8 [1] : vector<8x256xf32> to vector<8xf32>
    %11 = vector.shape_cast %10 : vector<8xf32> to vector<8x1xf32>
    %12 = arith.addf %9, %11 : vector<8x1xf32>
    %c0_9 = arith.constant 0 : index
    %c0_10 = arith.constant 0 : index
    %13 = vector.load %arg8[%c0_9, %c0_10] : memref<8x1xf32, #tpu.memory_space<vmem>>, vector<8x1xf32>
    tpu.vector_store %arg8[%c0_9, %c0_10], %12 {strides = array<i32>} : memref<8x1xf32, #tpu.memory_space<vmem>>, vector<8x1xf32>,
    %c0_11 = arith.constant 0 : index
    %c0_12 = arith.constant 0 : index
    %14 = vector.load %arg9[%c0_11, %c0_12] : memref<8x1xf32, #tpu.memory_space<vmem>>, vector<8x1xf32>
    %15 = arith.mulf %8, %8 : vector<8x256xf32>
    %cst_13 = arith.constant dense<0.000000e+00> : vector<8xf32>
    %16 = vector.multi_reduction <add>, %15, %cst_13 [1] : vector<8x256xf32> to vector<8xf32>
    %17 = vector.shape_cast %16 : vector<8xf32> to vector<8x1xf32>
    %18 = arith.addf %14, %17 : vector<8x1xf32>
    %c0_14 = arith.constant 0 : index
    %c0_15 = arith.constant 0 : index
    %19 = vector.load %arg9[%c0_14, %c0_15] : memref<8x1xf32, #tpu.memory_space<vmem>>, vector<8x1xf32>
    tpu.vector_store %arg9[%c0_14, %c0_15], %18 {strides = array<i32>} : memref<8x1xf32, #tpu.memory_space<vmem>>, vector<8x1xf32>,
    %c1_i32 = arith.constant 1 : i32
    %20 = arith.cmpi eq, %arg0, %c1_i32 : i32
    %c0_i32_16 = arith.constant 0 : i32
    %21 = arith.cmpi eq, %arg1, %c0_i32_16 : i32
    %22 = arith.andi %20, %21 : i1
    %23 = arith.extui %22 : i1 to i32
    %c0_i32_17 = arith.constant 0 : i32
    %24 = arith.cmpi ne, %23, %c0_i32_17 : i32
    scf.if %24 {
      %c0_18 = arith.constant 0 : index
      %c0_19 = arith.constant 0 : index
      %25 = vector.load %arg8[%c0_18, %c0_19] : memref<8x1xf32, #tpu.memory_space<vmem>>, vector<8x1xf32>
      %cst_20 = arith.constant 5.120000e+02 : f32
      %26 = vector.broadcast %cst_20 : f32 to vector<8x1xf32>
      %27 = arith.divf %25, %26 : vector<8x1xf32>
      %c0_21 = arith.constant 0 : index
      %c0_22 = arith.constant 0 : index
      %28 = vector.load %arg9[%c0_21, %c0_22] : memref<8x1xf32, #tpu.memory_space<vmem>>, vector<8x1xf32>
      %cst_23 = arith.constant 5.120000e+02 : f32
      %29 = vector.broadcast %cst_23 : f32 to vector<8x1xf32>
      %30 = arith.divf %28, %29 : vector<8x1xf32>
      %31 = arith.mulf %27, %27 : vector<8x1xf32>
      %32 = arith.subf %30, %31 : vector<8x1xf32>
      %cst_24 = arith.constant 0.000000e+00 : f32
      %33 = vector.broadcast %cst_24 : f32 to vector<8x1xf32>
      %34 = arith.maximumf %32, %33 : vector<8x1xf32>
      %cst_25 = arith.constant 9.99999974E-6 : f32
      %35 = vector.broadcast %cst_25 : f32 to vector<8x1xf32>
      %36 = arith.addf %34, %35 : vector<8x1xf32>
      %37 = math.rsqrt %36 : vector<8x1xf32>
      %c0_26 = arith.constant 0 : index
      %c0_27 = arith.constant 0 : index
      %38 = vector.load %arg4[%c0_26, %c0_27] : memref<8x1xf32, #tpu.memory_space<vmem>>, vector<8x1xf32>
      %39 = arith.mulf %38, %37 : vector<8x1xf32>
      %c0_28 = arith.constant 0 : index
      %c0_29 = arith.constant 0 : index
      %40 = vector.load %arg6[%c0_28, %c0_29] : memref<8x1xf32, #tpu.memory_space<vmem>>, vector<8x1xf32>
      tpu.vector_store %arg6[%c0_28, %c0_29], %39 {strides = array<i32>} : memref<8x1xf32, #tpu.memory_space<vmem>>, vector<8x1xf32>,
      %c0_30 = arith.constant 0 : index
      %c0_31 = arith.constant 0 : index
      %41 = vector.load %arg5[%c0_30, %c0_31] : memref<8x1xf32, #tpu.memory_space<vmem>>, vector<8x1xf32>
      %42 = arith.mulf %27, %39 : vector<8x1xf32>
      %43 = arith.subf %41, %42 : vector<8x1xf32>
      %c0_32 = arith.constant 0 : index
      %c0_33 = arith.constant 0 : index
      %44 = vector.load %arg7[%c0_32, %c0_33] : memref<8x1xf32, #tpu.memory_space<vmem>>, vector<8x1xf32>
      tpu.vector_store %arg7[%c0_32, %c0_33], %43 {strides = array<i32>} : memref<8x1xf32, #tpu.memory_space<vmem>>, vector<8x1xf32>,
    } else {
    }
    return
  }
  func.func @transform_0(%arg0: i32, %arg1: i32) -> (i32, i32, i32) {
    %c0_i32 = arith.constant 0 : i32
    %c0_i32_0 = arith.constant 0 : i32
    return %arg0, %c0_i32, %arg1 : i32, i32, i32
  }
  func.func @transform_1(%arg0: i32, %arg1: i32) -> (i32, i32) {
    %c0_i32 = arith.constant 0 : i32
    %c0_i32_0 = arith.constant 0 : i32
    %c0_i32_1 = arith.constant 0 : i32
    return %c0_i32, %c0_i32_0 : i32, i32
  }
  func.func @transform_2(%arg0: i32, %arg1: i32) -> (i32, i32) {
    %c0_i32 = arith.constant 0 : i32
    %c0_i32_0 = arith.constant 0 : i32
    %c0_i32_1 = arith.constant 0 : i32
    return %c0_i32, %c0_i32_0 : i32, i32
  }
  func.func @transform_3(%arg0: i32, %arg1: i32) -> (i32, i32) {
    %c0_i32 = arith.constant 0 : i32
    %c0_i32_0 = arith.constant 0 : i32
    %c0_i32_1 = arith.constant 0 : i32
    return %c0_i32, %c0_i32_0 : i32, i32
  }
  func.func @transform_4(%arg0: i32, %arg1: i32) -> (i32, i32) {
    %c0_i32 = arith.constant 0 : i32
    %c0_i32_0 = arith.constant 0 : i32
    %c0_i32_1 = arith.constant 0 : i32
    return %c0_i32, %c0_i32_0 : i32, i32
  }
  func.func @transform_5(%arg0: i32, %arg1: i32) -> (i32, i32) {
    %c0_i32 = arith.constant 0 : i32
    %c0_i32_0 = arith.constant 0 : i32
    %c0_i32_1 = arith.constant 0 : i32
    return %c0_i32, %c0_i32_0 : i32, i32
  }
}

</mosaic_0001>

<llo_original>
// kernel: tpu_custom_call.1
$region0: #{tpu_custom_call.1}
  #allocation0 [shape = 'u32[]', space=smem, size = 0x4, offset = 0x4, fixed_abs, tag = 'smem constant byte address 0x4 - core index']
  #allocation1 [shape = 'u32[144,128]{1,0:T(1,128)}', space=vmem, size = 0x12000, scoped, tag = 'internal scratch']
  #allocation2 [shape = 'f32[8,1]{1,0:T(8,128)}', space=vmem, size = 0x1000, scoped, tag = 'scratch operand']
  #allocation3 [shape = 'f32[8,1]{1,0:T(8,128)}', space=vmem, size = 0x1000, scoped, tag = 'scratch operand']
  %s0 = inlined_call_operand.vmem [shape: f32[2,4,256], index: 0, kind: input, shape index: {}]
  %s1 = inlined_call_operand.vmem [shape: f32[8,4], index: 1, kind: input, shape index: {}]
  %s2 = inlined_call_operand.vmem [shape: f32[8,1], index: 2, kind: input, shape index: {}]
  %s3 = inlined_call_operand.vmem [shape: f32[8,1], index: 3, kind: input, shape index: {}]
  %s4 = inlined_call_operand.vmem [shape: f32[8,1], index: 4, kind: output, shape index: {0}]
  %s5 = inlined_call_operand.vmem [shape: f32[8,1], index: 5, kind: output, shape index: {1}]
  %6 = xla_tuple %s4, %s5
  %s7 = sld [smem:[#allocation0]]
  $region65: #{tpu_custom_call.1} parent=0
    _
  %s9 = ssub.s32 1, %s7
  %s10 = scalar_select 0, %s9, %s7
  loop: start=0, step=1, limit=4
  $region2: #{tpu_custom_call.1} parent=0 // loop_pre_header
    _
  $region3: #{tpu_custom_call.1} parent=0 // loop_header
    %s12 = sphi 0, %s16
    %p13 = scmp.ge.s32.totalorder %s12, 4
    %s19 = sphi 0, %s31
    %s20 = sphi 0, %s27
    %s21 = sphi 0, %s19
    %s22 = sphi 0, %s20
    %s23 = sphi 0, %s21
    %s24 = sphi 0, %s22
    %s36 = sphi 0, %s38
    %s39 = sphi 0, %s36
    %s40 = sphi 0, %s39
    %s56 = sphi 0, %s40
    %s60 = sphi 0, %s60
    %s62 = sphi 0, %s60
    %s63 = sphi 0, %s62
    %s77 = sphi 0, %s63
    %s81 = sphi 0, %s81
    %s83 = sphi 0, %s81
    %s84 = sphi 0, %s83
    %s98 = sphi 0, %s84
    %s102 = sphi 0, %s102
    %s104 = sphi 0, %s102
    %s105 = sphi 0, %s104
    %s119 = sphi 0, %s105
    %s123 = sphi 0, %s123
    %s125 = sphi 0, %s123
    %s126 = sphi 0, %s125
    %s140 = sphi 0, %s126
    %s144 = sphi 0, %s144
    %s146 = sphi 0, %s144
    %s147 = sphi 0, %s146
    %s161 = sphi 0, %s147
  $region4: #{tpu_custom_call.1} parent=0 // loop_header_branch
    %15 = sbr.rel (%p13) target = $region8
  $region5: #{tpu_custom_call.1} parent=0 // loop_body
    %s17 = ssub.s32 %s12, 1
    %s18 = ssub.s32 %s12, 2
    %s25 = sadd.s32 1, %s20
    %p26 = scmp.ge.s32.totalorder %s25, 1
    %s27 = scalar_select %p26, 0, %s25
    %s28 = sadd.s32 1, %s19
    %s29 = scalar_select %p26, %s28, %s19
    %p30 = scmp.ge.s32.totalorder %s29, 2
    %s31 = scalar_select %p30, 0, %s29
    %s32 = ssub.s32 %s19, %s31
    %s33 = ssub.s32 %s20, %s27
    %s34 = sor.u32 %s32, %s33
    %p35 = scmp.eq.s32.totalorder %s34, 0
    %s37 = sadd.s32 %s36, 1
    %s38 = scalar_select %p35, %s36, %s37
    %p41 = pneg %p35
    %p42 = scmp.eq.s32.totalorder %s12, 1
    %p43 = por %p41, %p42
    %p44 = scmp.ne.s32.totalorder %s36, %s39
    %p45 = scmp.eq.s32.totalorder %s12, 0
    %p46 = por %p44, %p45
    %p47 = scmp.ne.s32.totalorder %s36, %s39
    %p48 = scmp.eq.s32.totalorder %s17, 1
    %p49 = por %p47, %p48
    %p50 = scmp.ne.s32.totalorder %s39, %s40
    %p51 = scmp.eq.s32.totalorder %s17, 0
    %p52 = por %p50, %p51
    %p53 = scmp.ne.s32.totalorder %s39, %s40
    %p54 = scmp.eq.s32.totalorder %s18, 1
    %p55 = por %p53, %p54
    %p57 = scmp.ne.s32.totalorder %s40, %s56
    %p58 = scmp.eq.s32.totalorder %s18, 0
    %p59 = por %p57, %p58
    %s61 = sadd.s32 %s60, 1
    %p64 = scmp.eq.s32.totalorder %s12, 1
    %p65 = scmp.ne.s32.totalorder %s60, %s62
    %p66 = scmp.eq.s32.totalorder %s12, 0
    %p67 = por %p65, %p66
    %p68 = scmp.ne.s32.totalorder %s60, %s62
    %p69 = scmp.eq.s32.totalorder %s17, 1
    %p70 = por %p68, %p69
    %p71 = scmp.ne.s32.totalorder %s62, %s63
    %p72 = scmp.eq.s32.totalorder %s17, 0
    %p73 = por %p71, %p72
    %p74 = scmp.ne.s32.totalorder %s62, %s63
    %p75 = scmp.eq.s32.totalorder %s18, 1
    %p76 = por %p74, %p75
    %p78 = scmp.ne.s32.totalorder %s63, %s77
    %p79 = scmp.eq.s32.totalorder %s18, 0
    %p80 = por %p78, %p79
    %s82 = sadd.s32 %s81, 1
    %p85 = scmp.eq.s32.totalorder %s12, 1
    %p86 = scmp.ne.s32.totalorder %s81, %s83
    %p87 = scmp.eq.s32.totalorder %s12, 0
    %p88 = por %p86, %p87
    %p89 = scmp.ne.s32.totalorder %s81, %s83
    %p90 = scmp.eq.s32.totalorder %s17, 1
    %p91 = por %p89, %p90
    %p92 = scmp.ne.s32.totalorder %s83, %s84
    %p93 = scmp.eq.s32.totalorder %s17, 0
    %p94 = por %p92, %p93
    %p95 = scmp.ne.s32.totalorder %s83, %s84
    %p96 = scmp.eq.s32.totalorder %s18, 1
    %p97 = por %p95, %p96
    %p99 = scmp.ne.s32.totalorder %s84, %s98
    %p100 = scmp.eq.s32.totalorder %s18, 0
    %p101 = por %p99, %p100
    %s103 = sadd.s32 %s102, 1
    %p106 = scmp.eq.s32.totalorder %s12, 1
    %p107 = scmp.ne.s32.totalorder %s102, %s104
    %p108 = scmp.eq.s32.totalorder %s12, 0
    %p109 = por %p107, %p108
    %p110 = scmp.ne.s32.totalorder %s102, %s104
    %p111 = scmp.eq.s32.totalorder %s17, 1
    %p112 = por %p110, %p111
    %p113 = scmp.ne.s32.totalorder %s104, %s105
    %p114 = scmp.eq.s32.totalorder %s17, 0
    %p115 = por %p113, %p114
    %p116 = scmp.ne.s32.totalorder %s104, %s105
    %p117 = scmp.eq.s32.totalorder %s18, 1
    %p118 = por %p116, %p117
    %p120 = scmp.ne.s32.totalorder %s105, %s119
    %p121 = scmp.eq.s32.totalorder %s18, 0
    %p122 = por %p120, %p121
    %s124 = sadd.s32 %s123, 1
    %p127 = scmp.eq.s32.totalorder %s12, 1
    %p128 = scmp.ne.s32.totalorder %s123, %s125
    %p129 = scmp.eq.s32.totalorder %s12, 0
    %p130 = por %p128, %p129
    %p131 = scmp.ne.s32.totalorder %s123, %s125
    %p132 = scmp.eq.s32.totalorder %s17, 1
    %p133 = por %p131, %p132
    %p134 = scmp.ne.s32.totalorder %s125, %s126
    %p135 = scmp.eq.s32.totalorder %s17, 0
    %p136 = por %p134, %p135
    %p137 = scmp.ne.s32.totalorder %s125, %s126
    %p138 = scmp.eq.s32.totalorder %s18, 1
    %p139 = por %p137, %p138
    %p141 = scmp.ne.s32.totalorder %s126, %s140
    %p142 = scmp.eq.s32.totalorder %s18, 0
    %p143 = por %p141, %p142
    %s145 = sadd.s32 %s144, 1
    %p148 = scmp.eq.s32.totalorder %s12, 1
    %p149 = scmp.ne.s32.totalorder %s144, %s146
    %p150 = scmp.eq.s32.totalorder %s12, 0
    %p151 = por %p149, %p150
    %p152 = scmp.ne.s32.totalorder %s144, %s146
    %p153 = scmp.eq.s32.totalorder %s17, 1
    %p154 = por %p152, %p153
    %p155 = scmp.ne.s32.totalorder %s146, %s147
    %p156 = scmp.eq.s32.totalorder %s17, 0
    %p157 = por %p155, %p156
    %p158 = scmp.ne.s32.totalorder %s146, %s147
    %p159 = scmp.eq.s32.totalorder %s18, 1
    %p160 = por %p158, %p159
    %p162 = scmp.ne.s32.totalorder %s147, %s161
    %p163 = scmp.eq.s32.totalorder %s18, 0
    %p164 = por %p162, %p163
    %p165 = scmp.le.s32.totalorder 1, %s12
    %p166 = scmp.lt.s32.totalorder %s12, 3
    %p167 = pnand %p165, %p166
    %p168 = pneg %p167
    // Predicated region
    $region9: #{tpu_custom_call.1} parent=5 // pred_check
      _
    $region10: #{tpu_custom_call.1} parent=5 // pred_check_branch
      %170 = sbr.rel (%p167) target = $region12
    $region11: #{tpu_custom_call.1} parent=5 // pred_region
      %s171 = ssub.s32 %s12, 1
      // Predicated region
      $region13: #{tpu_custom_call.1} parent=11 // pred_check
        %p172 = pneg %p73
      $region14: #{tpu_custom_call.1} parent=11 // pred_check_branch
        %174 = sbr.rel (%p172) target = $region16
      $region15: #{tpu_custom_call.1} parent=11 // pred_region
        _
      $region16: #{tpu_custom_call.1} parent=11 // pred_fallthru
        _
      // Predicated region
      $region17: #{tpu_custom_call.1} parent=11 // pred_check
        %p175 = pneg %p94
      $region18: #{tpu_custom_call.1} parent=11 // pred_check_branch
        %177 = sbr.rel (%p175) target = $region20
      $region19: #{tpu_custom_call.1} parent=11 // pred_region
        _
      $region20: #{tpu_custom_call.1} parent=11 // pred_fallthru
        _
      // Predicated region
      $region21: #{tpu_custom_call.1} parent=11 // pred_check
        %p178 = pneg %p115
      $region22: #{tpu_custom_call.1} parent=11 // pred_check_branch
        %180 = sbr.rel (%p178) target = $region24
      $region23: #{tpu_custom_call.1} parent=11 // pred_region
        _
      $region24: #{tpu_custom_call.1} parent=11 // pred_fallthru
        _
    $region12: #{tpu_custom_call.1} parent=5 // pred_fallthru
      _
    %p181 = scmp.lt.s32.totalorder %s12, 2
    // Predicated region
    $region25: #{tpu_custom_call.1} parent=5 // pred_check
      %p182 = pneg %p181
    $region26: #{tpu_custom_call.1} parent=5 // pred_check_branch
      %184 = sbr.rel (%p182) target = $region28
    $region27: #{tpu_custom_call.1} parent=5 // pred_region
      // Predicated region
      $region29: #{tpu_custom_call.1} parent=27 // pred_check
        %p185 = pneg %p46
      $region30: #{tpu_custom_call.1} parent=27 // pred_check_branch
        %187 = sbr.rel (%p185) target = $region32
      $region31: #{tpu_custom_call.1} parent=27 // pred_region
        %s188 = smul.u32 2, %s20
        %p189 = scmp.lt.s32.totalorder %s19, 1
        %s190 = scalar_select %p189, %s19, 1
        %p191 = scmp.lt.s32.totalorder %s188, 1
        %s192 = scalar_select %p191, %s188, 1
        %s193 = smul.addr %s190, 2
        %s194 = sadd.s32 %s192, %s193
        %s195 = smul.addr %s194, 4
        %s196 = scalar_lea.vmem %s0, %s195
        %s197 = smul.u32 2, %s20
      $region32: #{tpu_custom_call.1} parent=27 // pred_fallthru
        _
    $region28: #{tpu_custom_call.1} parent=5 // pred_fallthru
      _
    %p198 = scmp.le.s32.totalorder 1, %s12
    %p199 = scmp.lt.s32.totalorder %s12, 3
    %p200 = pnand %p198, %p199
    %p201 = pneg %p200
    // Predicated region
    $region33: #{tpu_custom_call.1} parent=5 // pred_check
      _
    $region34: #{tpu_custom_call.1} parent=5 // pred_check_branch
      %203 = sbr.rel (%p200) target = $region36
    $region35: #{tpu_custom_call.1} parent=5 // pred_region
      %s204 = ssub.s32 %s12, 1
      %s205 = smul.u32 2, %s22
      %p206 = scmp.lt.s32.totalorder %s21, 1
      %s207 = scalar_select %p206, %s21, 1
      %p208 = scmp.lt.s32.totalorder %s205, 1
      %s209 = scalar_select %p208, %s205, 1
      %s210 = smul.addr %s207, 2
      %s211 = sadd.s32 %s209, %s210
      %s212 = smul.addr %s211, 4
      %s213 = scalar_lea.vmem %s0, %s212
      %p214 = pneg %p52
      %p215 = pneg %p49
      %p216 = pneg %p73
      %p217 = pneg %p70
      %p218 = pneg %p94
      %p219 = pneg %p91
      %p220 = pneg %p115
      %p221 = pneg %p112
      %p222 = pneg %p136
      %p223 = pneg %p133
      %p224 = pneg %p157
      %p225 = pneg %p154
      %s226 = smul.u32 2, %s22
      %p227 = scmp.lt.s32.totalorder %s21, 1
      %s228 = scalar_select %p227, %s21, 1
      %p229 = scmp.lt.s32.totalorder %s226, 1
      %s230 = scalar_select %p229, %s226, 1
      %s231 = smul.addr %s228, 2
      %s232 = sadd.s32 %s230, %s231
      %s233 = smul.addr %s232, 4
      %s234 = scalar_lea.vmem %s0, %s233
      %s235 = smul.u32 2, %s22
      %p236 = scmp.eq.s32.totalorder %s21, 0
      %p237 = scmp.eq.s32.totalorder %s22, 0
      %p238 = pnand %p236, %p237
      %p239 = pneg %p238
      // Predicated region
      $region37: #{tpu_custom_call.1} parent=35 // pred_check
        _
      $region38: #{tpu_custom_call.1} parent=35 // pred_check_branch
        %241 = sbr.rel (%p238) target = $region40
      $region39: #{tpu_custom_call.1} parent=35 // pred_region
        %vm242 = vcmask 7168
        %243 = vst.msk [vmem:[#allocation2] sm:$0xff] %vm242, 0.0
        %244 = vst.msk [vmem:[#allocation3] sm:$0xff] %vm242, 0.0
      $region40: #{tpu_custom_call.1} parent=35 // pred_fallthru
        _
      %v245 = vld [vmem:[%s1] sm:$0xff]
      %v246 = vld [vmem:[%s234] sm:$0xff]
      %v248 = vcombine.high %v246, %v246
      %vm249 = vcmask 31744
      %v251 = vsel %vm249, %v245, 0
      %vm253 = vcmask 1043456
      %v254 = vsel %vm253, %v246, 0
      %v256 = vsel %vm253, %v248, 0
      %258 = vmatprep.subr.mxu0 %v256
      %259 = vmatpush1.msra.mxu0 %v254
      %260 = vmatprep.subr.mxu0 0.0
      %261 = vmatpush1.msra.mxu0 0.0
      %262 = vmatprep.subr.mxu0 0.0
      %263 = vmatpush1.msra.mxu0 0.0
      %264 = vmatprep.subr.mxu0 0.0
      %265 = vmatpush1.msra.mxu0 0.0
      %266 = vmatprep.subr.mxu0 0.0
      %267 = vmatpush1.msra.mxu0 0.0
      %268 = vmatprep.subr.mxu0 0.0
      %269 = vmatpush1.msra.mxu0 0.0
      %270 = vmatprep.subr.mxu0 0.0
      %271 = vmatpush1.msra.mxu0 0.0
      %272 = vmatprep.subr.mxu0 0.0
      %273 = vmatpush1.msra.mxu0 0.0
      %274 = vmatprep.subr.mxu0 0.0
      %275 = vmatpush1.msra.mxu0 0.0
      %276 = vmatprep.subr.mxu0 0.0
      %277 = vmatpush1.msra.mxu0 0.0
      %278 = vmatprep.subr.mxu0 0.0
      %279 = vmatpush1.msra.mxu0 0.0
      %280 = vmatprep.subr.mxu0 0.0
      %281 = vmatpush1.msra.mxu0 0.0
      %282 = vmatprep.subr.mxu0 0.0
      %283 = vmatpush1.msra.mxu0 0.0
      %284 = vmatprep.subr.mxu0 0.0
      %285 = vmatpush1.msra.mxu0 0.0
      %286 = vmatprep.subr.mxu0 0.0
      %287 = vmatpush1.msra.mxu0 0.0
      %288 = vmatprep.subr.mxu0 0.0
      %289 = vmatpush1.msra.mxu0 0.0
      %290 = vmatprep.subr.mxu0 0.0
      %291 = vmatpush1.msra.mxu0 0.0
      %292 = vmatprep.subr.mxu0 0.0
      %293 = vmatpush1.msra.mxu0 0.0
      %294 = vmatprep.subr.mxu0 0.0
      %295 = vmatpush1.msra.mxu0 0.0
      %296 = vmatprep.subr.mxu0 0.0
      %297 = vmatpush1.msra.mxu0 0.0
      %298 = vmatprep.subr.mxu0 0.0
      %299 = vmatpush1.msra.mxu0 0.0
      %300 = vmatprep.subr.mxu0 0.0
      %301 = vmatpush1.msra.mxu0 0.0
      %302 = vmatprep.subr.mxu0 0.0
      %303 = vmatpush1.msra.mxu0 0.0
      %304 = vmatprep.subr.mxu0 0.0
      %305 = vmatpush1.msra.mxu0 0.0
      %306 = vmatprep.subr.mxu0 0.0
      %307 = vmatpush1.msra.mxu0 0.0
      %308 = vmatprep.subr.mxu0 0.0
      %309 = vmatpush1.msra.mxu0 0.0
      %310 = vmatprep.subr.mxu0 0.0
      %311 = vmatpush1.msra.mxu0 0.0
      %312 = vmatprep.subr.mxu0 0.0
      %313 = vmatpush1.msra.mxu0 0.0
      %314 = vmatprep.subr.mxu0 0.0
      %315 = vmatpush1.msra.mxu0 0.0
      %316 = vmatprep.subr.mxu0 0.0
      %317 = vmatpush1.msra.mxu0 0.0
      %318 = vmatprep.subr.mxu0 0.0
      %319 = vmatpush1.msra.mxu0 0.0
      %320 = vmatprep.subr.mxu0 0.0
      %321 = vmatpush1.msra.mxu0 0.0
      %322 = vmatprep.mubr.f32.mxu0 0.0
      %323 = vmatmul.mubr.f32.gmra.mrb[0].mxu0 %v251
      %v324 = vpop.f32.mrb[0].mxu0
      %v325 = vadd.f32 0.0, %v324
      %v326 = vpop.f32.mrb[0].mxu0
      %v327 = vadd.f32 0.0, %v326
      %328 = vdwg.mxu0
      %v329 = vld [vmem:[#allocation2] sm:$0xff]
      %v330 = vadd.f32 %v325, %v327
      %331 = vadd.xlane.f32.xlu0 %v330
      %v332 = vpop.xlane.xlu0 %331
      %v333 = vadd.f32 %v329, %v332
      %vm334 = vcmask 7168
      %335 = vst.msk [vmem:[#allocation2] sm:$0xff] %vm334, %v333
      %v336 = vld [vmem:[#allocation3] sm:$0xff]
      %v337 = vmul.f32 %v325, %v325
      %v338 = vmul.f32 %v327, %v327
      %v339 = vadd.f32 %v337, %v338
      %340 = vadd.xlane.f32.xlu0 %v339
      %v341 = vpop.xlane.xlu0 %340
      %v342 = vadd.f32 %v336, %v341
      %343 = vst.msk [vmem:[#allocation3] sm:$0xff] %vm334, %v342
      %p344 = scmp.eq.s32.totalorder %s21, 1
      %p345 = pnand %p344, %p237
      %p346 = pneg %p345
      // Predicated region
      $region41: #{tpu_custom_call.1} parent=35 // pred_check
        _
      $region42: #{tpu_custom_call.1} parent=35 // pred_check_branch
        %348 = sbr.rel (%p345) target = $region44
      $region43: #{tpu_custom_call.1} parent=35 // pred_region
        %v349 = vld [vmem:[#allocation2] sm:$0xff]
        %v350 = vrcp.pop 512.0
        %v351 = vmul.f32 %v349, %v350
        %v352 = vld [vmem:[#allocation3] sm:$0xff]
        %v353 = vmul.f32 %v352, %v350
        %v354 = vmul.f32 %v351, %v351
        %v355 = vsub.f32 %v353, %v354
        %v356 = vmax.f32 %v355, 0.0
        %v357 = vadd.f32 %v356, 1e-05
        %v358 = vrsqrt.pop %v357
        %v359 = vld [vmem:[%s2] sm:$0xff]
        %v360 = vmul.f32 %v359, %v358
        %361 = vst.msk [vmem:[%s4] sm:$0xff] %vm334, %v360
        %v362 = vld [vmem:[%s3] sm:$0xff]
        %v363 = vmul.f32 %v351, %v360
        %v364 = vsub.f32 %v362, %v363
        %365 = vst.msk [vmem:[%s5] sm:$0xff] %vm334, %v364
      $region44: #{tpu_custom_call.1} parent=35 // pred_fallthru
        _
      // Predicated region
      $region45: #{tpu_custom_call.1} parent=35 // pred_check
        %p366 = pneg %p133
      $region46: #{tpu_custom_call.1} parent=35 // pred_check_branch
        %368 = sbr.rel (%p366) target = $region48
      $region47: #{tpu_custom_call.1} parent=35 // pred_region
        _
      $region48: #{tpu_custom_call.1} parent=35 // pred_fallthru
        _
      // Predicated region
      $region49: #{tpu_custom_call.1} parent=35 // pred_check
        %p369 = pneg %p154
      $region50: #{tpu_custom_call.1} parent=35 // pred_check_branch
        %371 = sbr.rel (%p369) target = $region52
      $region51: #{tpu_custom_call.1} parent=35 // pred_region
        _
      $region52: #{tpu_custom_call.1} parent=35 // pred_fallthru
        _
      // Predicated region
      $region53: #{tpu_custom_call.1} parent=35 // pred_check
        %p372 = pneg %p133
      $region54: #{tpu_custom_call.1} parent=35 // pred_check_branch
        %374 = sbr.rel (%p372) target = $region56
      $region55: #{tpu_custom_call.1} parent=35 // pred_region
        _
      $region56: #{tpu_custom_call.1} parent=35 // pred_fallthru
        _
      // Predicated region
      $region57: #{tpu_custom_call.1} parent=35 // pred_check
        %p375 = pneg %p154
      $region58: #{tpu_custom_call.1} parent=35 // pred_check_branch
        %377 = sbr.rel (%p375) target = $region60
      $region59: #{tpu_custom_call.1} parent=35 // pred_region
        _
      $region60: #{tpu_custom_call.1} parent=35 // pred_fallthru
        _
    $region36: #{tpu_custom_call.1} parent=5 // pred_fallthru
      _
    %p378 = scmp.le.s32.totalorder 2, %s12
    // Predicated region
    $region61: #{tpu_custom_call.1} parent=5 // pred_check
      %p379 = pneg %p378
    $region62: #{tpu_custom_call.1} parent=5 // pred_check_branch
      %381 = sbr.rel (%p379) target = $region64
    $region63: #{tpu_custom_call.1} parent=5 // pred_region
      %s382 = ssub.s32 %s12, 2
    $region64: #{tpu_custom_call.1} parent=5 // pred_fallthru
      _
  $region6: #{tpu_custom_call.1} parent=0 // loop_footer
    %s16 = sadd.s32 1, %s12
  $region7: #{tpu_custom_call.1} parent=0 // loop_footer_branch
    %11 = sbr.rel target = $region3
  $region8: #{tpu_custom_call.1} parent=0 // loop_exit
    _

</llo_original>
